<compile_context>
chip_gen: v7x
topology: tpu7x:2x2x1
jax: 0.10.0
libtpu: 0.0.40
codegen_flags: <defaults>
</compile_context>

<pallas_src>
import jax
import jax.numpy as jnp
from jax.experimental import pallas as pl
from jax.experimental.pallas import tpu as pltpu


_LANE = 128      # TPU lane width (vreg last-dim extent)
_ROW_TILE = 128  # max rows per block (multiple of 8)
_L_TILE = 8192   # max lanes per block (multiple of 128); 4 MiB f32 at 128 rows


def _round_up(x, m):
    return ((x + m - 1) // m) * m


def _fold_chunks(x_ref, n_chunks):
    """Elementwise fold of chunks [0, n_chunks) (128 lanes each) of the current
    block.  Returns (running_max, running_sum), each (rows, 128) float32, or
    (None, None) if n_chunks == 0.  Pure VPU work; no cross-lane reductions."""
    if n_chunks <= 0:
        return None, None
    c0 = x_ref[:, 0:_LANE].astype(jnp.float32)
    if n_chunks == 1:
        return c0, c0
    if n_chunks <= 8:
        m = s = c0
        for k in range(1, n_chunks):
            c = x_ref[:, k * _LANE:(k + 1) * _LANE].astype(jnp.float32)
            m = jnp.maximum(m, c)
            s = s + c
        return m, s

    def body(k, carry):
        m, s = carry
        off = pl.multiple_of(k * _LANE, _LANE)
        c = x_ref[:, pl.ds(off, _LANE)].astype(jnp.float32)
        return jnp.maximum(m, c), s + c

    return jax.lax.fori_loop(1, n_chunks, body, (c0, c0), unroll=4)


def _masked_tail_chunk(x_ref, chunk_idx, valid_lanes):
    """Load 128-lane chunk `chunk_idx` and neutralize lanes >= valid_lanes:
    -inf for the max stream, 0 for the sum stream (garbage must never win)."""
    rows = x_ref.shape[0]
    off = chunk_idx * _LANE
    c = x_ref[:, off:off + _LANE].astype(jnp.float32)
    lane = jax.lax.broadcasted_iota(jnp.int32, (rows, _LANE), 1)
    valid = lane < valid_lanes
    return jnp.where(valid, c, -jnp.inf), jnp.where(valid, c, 0.0)


def _make_single_step_kernel(true_l):
    """L fits in one block (block last dim == L exactly): no column garbage and
    no cross-step accumulators needed."""
    inv_l = 1.0 / float(true_l)          # precomputed reciprocal (<=1 ulp vs divide)
    n_full = true_l // _LANE
    rem = true_l % _LANE

    def kernel(x_ref, out_ref):
        m, s = _fold_chunks(x_ref, n_full)
        if rem:
            c = x_ref[:, n_full * _LANE:true_l].astype(jnp.float32)
            t_max = jnp.max(c, axis=-1, keepdims=True)
            t_sum = jnp.sum(c, axis=-1, keepdims=True)
        if m is not None:
            row_max = jnp.max(m, axis=-1, keepdims=True)
            row_sum = jnp.sum(s, axis=-1, keepdims=True)
            if rem:
                row_max = jnp.maximum(row_max, t_max)
                row_sum = row_sum + t_sum
        else:
            row_max, row_sum = t_max, t_sum
        out_ref[:, 0:1] = row_max.astype(out_ref.dtype)
        out_ref[:, 1:2] = (row_sum * inv_l).astype(out_ref.dtype)

    return kernel


def _make_multi_step_kernel(l_blk, n_l_steps, true_l):
    """L spans several blocks: f32 (rows, 128) max/sum accumulators persist in
    VMEM scratch across the innermost ('arbitrary') L grid axis."""
    inv_l = 1.0 / float(true_l)
    n_chunks = l_blk // _LANE
    valid_last = true_l - (n_l_steps - 1) * l_blk     # in (0, l_blk]
    n_full_last = valid_last // _LANE
    rem_last = valid_last % _LANE

    def kernel(x_ref, out_ref, max_acc, sum_acc):
        l_step = pl.program_id(1)
        rows = x_ref.shape[0]

        @pl.when(l_step == 0)
        def _init():
            max_acc[...] = jnp.full((rows, _LANE), -jnp.inf, dtype=jnp.float32)
            sum_acc[...] = jnp.zeros((rows, _LANE), dtype=jnp.float32)

        # Hot path: fully-valid blocks -> pure unmasked max/add fold (VPU only).
        @pl.when(l_step < n_l_steps - 1)
        def _body():
            m, s = _fold_chunks(x_ref, n_chunks)
            max_acc[...] = jnp.maximum(max_acc[...], m)
            sum_acc[...] = sum_acc[...] + s

        # Final (possibly partial) block: fold valid chunks, mask only the single
        # crossing chunk, statically skip fully-out-of-range chunks, finalize.
        @pl.when(l_step == n_l_steps - 1)
        def _last():
            m, s = _fold_chunks(x_ref, n_full_last)
            if rem_last:
                cm, cs = _masked_tail_chunk(x_ref, n_full_last, rem_last)
                if m is None:
                    m, s = cm, cs
                else:
                    m = jnp.maximum(m, cm)
                    s = s + cs
            mx = jnp.maximum(max_acc[...], m)
            sm = sum_acc[...] + s
            row_max = jnp.max(mx, axis=-1, keepdims=True)
            row_avg = jnp.sum(sm, axis=-1, keepdims=True) * inv_l
            out_ref[:, 0:1] = row_max.astype(out_ref.dtype)
            out_ref[:, 1:2] = row_avg.astype(out_ref.dtype)

    return kernel


def adaptive_concat_pool1d(x, row_tile=_ROW_TILE, l_tile=_L_TILE):
    """x: (N, C, L) float array -> (N, 2*C, 1), matching AdaptiveConcatPool1d(size=1)."""
    # TODO(synk): only size=1 (the module default) is implemented; general adaptive
    # output sizes would need per-window start/end index math.
    assert jnp.issubdtype(x.dtype, jnp.floating), "floating input required (-inf mask)"
    assert row_tile % 8 == 0 and l_tile % _LANE == 0
    N, C, L = x.shape
    assert L >= 1
    R = N * C
    xf = x.reshape(R, L)

    # Row tiling: no padding -- partial boundary row blocks are fine (garbage rows
    # produce garbage outputs whose HBM writeback is clipped to R).  Keep >= 2 row
    # tiles when possible so the 'parallel' axis feeds both v7x TensorCores.
    if R <= 8:
        row_blk = R                                     # == full dim (always allowed)
    else:
        row_blk = min(row_tile, _round_up(-(-R // 2), 8))

    # L tiling: one exact-width block when L fits (no column garbage at all);
    # otherwise fixed 128-aligned blocks with a partial, in-kernel-masked tail.
    if L <= l_tile:
        l_blk, n_l_steps = L, 1
        kernel = _make_single_step_kernel(L)
        scratch = []
    else:
        l_blk = l_tile
        n_l_steps = pl.cdiv(L, l_blk)
        kernel = _make_multi_step_kernel(l_blk, n_l_steps, L)
        scratch = [pltpu.VMEM((row_blk, _LANE), jnp.float32),
                   pltpu.VMEM((row_blk, _LANE), jnp.float32)]

    grid = (pl.cdiv(R, row_blk), n_l_steps)
    out = pl.pallas_call(
        kernel,
        out_shape=jax.ShapeDtypeStruct((R, 2), x.dtype),
        grid_spec=pltpu.PrefetchScalarGridSpec(
            num_scalar_prefetch=0,
            grid=grid,
            in_specs=[pl.BlockSpec((row_blk, l_blk), lambda r, l: (r, l))],
            out_specs=pl.BlockSpec((row_blk, 2), lambda r, l: (r, 0)),
            scratch_shapes=scratch,
        ),
        compiler_params=pltpu.CompilerParams(
            # Row axis parallel (shards across v7x's 2 TensorCores); L reduction
            # axis last & arbitrary since its output block is revisited.
            dimension_semantics=("parallel", "arbitrary"),
            # Well above actual usage (~8 MiB double-buffered input blocks +
            # 128 KiB scratch), below every generation's physical VMEM.
            vmem_limit_bytes=48 * 1024 * 1024,
        ),
    )(xf)

    # (R, 2) -> (N, 2*C, 1) with the torch.cat([max, avg], dim=1) channel order.
    return out.reshape(N, C, 2).transpose(0, 2, 1).reshape(N, 2 * C, 1)


def _reference(x):
    mx = jnp.max(x, axis=-1, keepdims=True)
    av = jnp.mean(x, axis=-1, keepdims=True)
    return jnp.concatenate([mx, av], axis=1)


if __name__ == "__main__":
    key = jax.random.PRNGKey(0)

    # Small shape consistent with the module: (N, C, L) = (2, 4, 16).
    N, C, L = 2, 4, 16
    x = jax.random.normal(key, (N, C, L), dtype=jnp.float32)
    y = adaptive_concat_pool1d(x)
    jax.block_until_ready(y)
    assert y.shape == (N, 2 * C, 1), y.shape
    assert jnp.allclose(y, _reference(x), atol=1e-5, rtol=1e-5), "mismatch vs reference"

    # Extra self-checks: unaligned rows/columns (partial boundary blocks),
    # multi-L-step accumulation with/without a masked tail, small-R row splitting.
    checks = [
        ((4, 96, 700), {}),                 # single-step, 5 full chunks + 60-wide tail
        ((3, 50, 260), {}),                 # unaligned rows (150) -> 2 row tiles
        ((2, 8, 9000), {}),                 # multi-step (8192 + masked 808 tail)
        ((3, 50, 260), dict(l_tile=128)),   # multi-step, last block is mask-only
        ((2, 8, 512), dict(l_tile=128)),    # multi-step, exact multiple (no mask)
    ]
    for shape, kw in checks:
        k2 = jax.random.fold_in(key, shape[0] * shape[1] * shape[2] + len(kw))
        x2 = jax.random.normal(k2, shape, dtype=jnp.float32)
        y2 = adaptive_concat_pool1d(x2, **kw)
        jax.block_until_ready(y2)
        assert y2.shape == (shape[0], 2 * shape[1], 1), y2.shape
        assert jnp.allclose(y2, _reference(x2), atol=1e-4, rtol=1e-4), shape

    print("KERNEL_OK")
</pallas_src>

<mosaic_0001>
module attributes {stable_mosaic.version = 11 : i64} {
  func.func @kernel(%arg0: i32, %arg1: i32, %arg2: memref<8x16xf32, #tpu.memory_space<vmem>>, %arg3: memref<8x2xf32, #tpu.memory_space<vmem>>) attributes {dimension_semantics = [#tpu.dimension_semantics<parallel>, #tpu.dimension_semantics<arbitrary>], iteration_bounds = array<i64: 1, 1>, scalar_prefetch = 0 : i64, scratch_operands = 0 : i64, tpu.core_type = #tpu.core_type<tc>, window_params = [{transform_indices = @transform_0, window_bounds = array<i64: 8, 16>}, {transform_indices = @transform_1, window_bounds = array<i64: 8, 2>}]} {
    %c0 = arith.constant 0 : index
    %c0_0 = arith.constant 0 : index
    %0 = vector.load %arg2[%c0, %c0_0] : memref<8x16xf32, #tpu.memory_space<vmem>>, vector<8x16xf32>
    %cst = arith.constant dense<0xFF800000> : vector<8xf32>
    %1 = vector.multi_reduction <maximumf>, %0, %cst [1] : vector<8x16xf32> to vector<8xf32>
    %2 = vector.shape_cast %1 : vector<8xf32> to vector<8x1xf32>
    %cst_1 = arith.constant dense<0.000000e+00> : vector<8xf32>
    %3 = vector.multi_reduction <add>, %0, %cst_1 [1] : vector<8x16xf32> to vector<8xf32>
    %4 = vector.shape_cast %3 : vector<8xf32> to vector<8x1xf32>
    %c0_2 = arith.constant 0 : index
    %c0_3 = arith.constant 0 : index
    %5 = vector.load %arg3[%c0_2, %c0_3] : memref<8x2xf32, #tpu.memory_space<vmem>>, vector<8x1xf32>
    tpu.vector_store %arg3[%c0_2, %c0_3], %2 {strides = array<i32>} : memref<8x2xf32, #tpu.memory_space<vmem>>, vector<8x1xf32>,
    %cst_4 = arith.constant 6.250000e-02 : f32
    %6 = vector.broadcast %cst_4 : f32 to vector<8x1xf32>
    %7 = arith.mulf %4, %6 : vector<8x1xf32>
    %c0_5 = arith.constant 0 : index
    %c1 = arith.constant 1 : index
    %8 = vector.load %arg3[%c0_5, %c1] : memref<8x2xf32, #tpu.memory_space<vmem>>, vector<8x1xf32>
    tpu.vector_store %arg3[%c0_5, %c1], %7 {strides = array<i32>} : memref<8x2xf32, #tpu.memory_space<vmem>>, vector<8x1xf32>,
    return
  }
  func.func @transform_0(%arg0: i32, %arg1: i32) -> (i32, i32) {
    %c0_i32 = arith.constant 0 : i32
    return %arg0, %arg1 : i32, i32
  }
  func.func @transform_1(%arg0: i32, %arg1: i32) -> (i32, i32) {
    %c0_i32 = arith.constant 0 : i32
    %c0_i32_0 = arith.constant 0 : i32
    return %arg0, %c0_i32 : i32, i32
  }
}

</mosaic_0001>

<llo_original>
// kernel: tpu_custom_call.1
$region0: #{tpu_custom_call.1}
  #allocation0 [shape = 'u32[]', space=smem, size = 0x4, offset = 0x4, fixed_abs, tag = 'smem constant byte address 0x4 - core index']
  #allocation1 [shape = 'u32[144,128]{1,0:T(1,128)}', space=vmem, size = 0x12000, scoped, tag = 'internal scratch']
  %s0 = inlined_call_operand.hbm [shape: f32[8,16], index: 0, kind: input, shape index: {}]
  %s1 = inlined_call_operand.vmem [shape: f32[8,2], index: 1, kind: output, shape index: {}]
  %s2 = sld [smem:[#allocation0]]
  $region18: #{tpu_custom_call.1} parent=0
    _
  %s4 = ssub.s32 1, %s2
  %s5 = scalar_select 0, %s4, %s2
  $region1: #{tpu_custom_call.1} parent=0
    #allocation2 [shape = 'u8[4096]{0}', space=vmem, size = 0x1000, scoped, tag = 'input window, operand 0, single buffered']
    #allocation3 [shape = 's32[1]{0}', space=sflag, size = 0x4, scoped, tag = 'scoped memory for tpu_custom_call.1']
    %6 = vsyncpa [#allocation3], 0
    // Predicated region
    $region2: #{tpu_custom_call.1} parent=1 // pred_check
      _
    $region3: #{tpu_custom_call.1} parent=1 // pred_check_branch
      %8 = sbr.rel (0) target = $region5
    $region4: #{tpu_custom_call.1} parent=1 // pred_region
      %s10 = ssub.s32 128, 128
      %11 = vsyncadd [#allocation3], %s10
      %s13 = sshll.u32 [#allocation2], 4
      %s14 = int_to_ptr.vmem [resolvable:$true] %s13
      %16 = dma.hbm_to_vmem [thread:$0]  %s0, 128, %s14, [#allocation3]
    $region5: #{tpu_custom_call.1} parent=1 // pred_fallthru
      _
    // Predicated region
    $region6: #{tpu_custom_call.1} parent=1 // pred_check
      _
    $region7: #{tpu_custom_call.1} parent=1 // pred_check_branch
      %18 = sbr.rel (0) target = $region9
    $region8: #{tpu_custom_call.1} parent=1 // pred_region
      %19 = dma.done [#allocation3], 128
    $region9: #{tpu_custom_call.1} parent=1 // pred_fallthru
      _
    %v20 = vld [vmem:[#allocation2] sm:$0xff]
    %vm21 = vcmask 130048
    %v22 = vsel %vm21, %v20, -inf
    %23 = vmax.xlane.f32.xlu0 %v22
    %v24 = vpop.xlane.xlu0 %23
    %v25 = vsel %vm21, %v20, 0.0
    %26 = vadd.xlane.f32.xlu0 %v25
    %v27 = vpop.xlane.xlu0 %26
    %vm28 = vcmask 7168
    %29 = vst.msk [vmem:[%s1] sm:$0xff] %vm28, %v24
    %v30 = vmul.f32 %v27, 0.0625
    %vm31 = vcmask 15368
    %32 = vst.msk [vmem:[%s1] sm:$0xff] %vm31, %v30
    // Predicated region
    $region10: #{tpu_custom_call.1} parent=1 // pred_check
      _
    $region11: #{tpu_custom_call.1} parent=1 // pred_check_branch
      %34 = sbr.rel (0) target = $region13
    $region12: #{tpu_custom_call.1} parent=1 // pred_region
      _
    $region13: #{tpu_custom_call.1} parent=1 // pred_fallthru
      _
    // Predicated region
    $region14: #{tpu_custom_call.1} parent=1 // pred_check
      _
    $region15: #{tpu_custom_call.1} parent=1 // pred_check_branch
      %36 = sbr.rel (0) target = $region17
    $region16: #{tpu_custom_call.1} parent=1 // pred_region
      _
    $region17: #{tpu_custom_call.1} parent=1 // pred_fallthru
      _
    %37 = vsyncpa [#allocation3], 1

</llo_original>
